<compile_context>
chip_gen: v7x
topology: tpu7x:2x2x1
jax: 0.10.0
libtpu: 0.0.40
codegen_flags: <defaults>
</compile_context>

<pallas_src>
import jax
import jax.numpy as jnp
import numpy as np
from jax import lax
from jax.experimental import pallas as pl
from jax.experimental.pallas import tpu as pltpu


def _temporal_attention_kernel(x_ref, w_ref, be_ref, ve_ref, o_ref):
    # x_ref  : (Bblk, N, F, T)   native PyTorch layout (no wrapper transpose)
    # w_ref  : (2, F, 1)         row 0 = U1 @ U2, row 1 = U3
    # be_ref : (1, T, T)
    # ve_ref : (T, T)
    # o_ref  : (Bblk, T, T)
    bblk, n, f, t = x_ref.shape

    # Leading-dim merge only (layout-free): keep value ops at rank <= 3.
    x = x_ref[...].reshape(bblk * n, f, t)                 # (Bblk*N, F, T)
    w = w_ref[...]                                         # (2, F, 1)
    be = be_ref[...]                                       # (1, T, T) -> bcast
    ve = ve_ref[...]                                       # (T, T)

    u12 = w[0][None, :, :]                                 # (1, F, 1)
    u3 = w[1][None, :, :]                                  # (1, F, 1)

    # Single-pass VPU broadcast-multiply + sublane reduce over F (F is tiny):
    #   L[b, n, i] = sum_f x[b, n, f, i] * (U1@U2)[f]   == lhs[b, i, n]
    #   R[b, n, j] = sum_f x[b, n, f, j] * U3[f]        == rhs[b, n, j]
    L = jnp.sum(x * u12, axis=1).reshape(bblk, n, t)       # (Bblk, N, T)
    R = jnp.sum(x * u3, axis=1).reshape(bblk, n, t)        # (Bblk, N, T)

    # product[b, i, j] = sum_n lhs[b, i, n] * rhs[b, n, j]
    #                  = sum_n L[b, n, i] * R[b, n, j]    (batched MXU dot)
    product = jnp.einsum('bni,bnj->bij', L, R,
                         preferred_element_type=jnp.float32)  # (Bblk, T, T)

    sig = jax.nn.sigmoid(product + be)                     # (Bblk, T, T)

    # E[b, i, k] = sum_j Ve[i, j] * sig[b, j, k]; broadcast Ve over the (tiny)
    # batch dim so the batched dot lands directly in (b, i, k) order -- the
    # dim=1 softmax below is then a plain sublane reduce, no transposes.
    ve_b = jnp.broadcast_to(ve[None, :, :], (bblk, t, t))  # (Bblk, T, T)
    e = jnp.einsum('bij,bjk->bik', ve_b, sig,
                   preferred_element_type=jnp.float32)     # (Bblk, T, T)

    # softmax over dim=1 of (B, T, T)  (numerically stabilized)
    e_max = jnp.max(e, axis=1, keepdims=True)
    ex = jnp.exp(e - e_max)
    o_ref[...] = (ex / jnp.sum(ex, axis=1, keepdims=True)).astype(o_ref.dtype)


def _pick_block_b(B, max_blk=8):
    """Largest divisor of B that is <= max_blk while keeping >= 2 grid steps
    (so both v7x TensorCores get work); falls back to 1."""
    best = 1
    for cand in range(1, min(B, max_blk) + 1):
        if B % cand == 0 and (B // cand >= 2 or B == 1):
            best = cand
    return best


def temporal_attention(x, U1, U2, U3, be, Ve, block_b=None):
    """x: (B, N, F_in, T) float32 (native PyTorch layout). Returns (B, T, T)."""
    B, N, F_in, T = x.shape

    # Algebraic fusion: lhs = x.permute(0,3,1,2) @ (U1 @ U2). Stack the two
    # tiny F-length weights into a single kernel input.
    u12 = jnp.dot(U1, U2)                                  # (F_in,)
    w = jnp.stack([u12, U3], axis=0)[..., None]            # (2, F_in, 1)

    if block_b is None:
        block_b = _pick_block_b(B)
    grid_b = B // block_b

    return pl.pallas_call(
        _temporal_attention_kernel,
        out_shape=jax.ShapeDtypeStruct((B, T, T), x.dtype),
        grid_spec=pltpu.PrefetchScalarGridSpec(
            num_scalar_prefetch=0,
            grid=(grid_b,),
            in_specs=[
                pl.BlockSpec((block_b, N, F_in, T), lambda i: (i, 0, 0, 0)),
                pl.BlockSpec((2, F_in, 1), lambda i: (0, 0, 0)),
                pl.BlockSpec((1, T, T), lambda i: (0, 0, 0)),
                pl.BlockSpec((T, T), lambda i: (0, 0)),
            ],
            out_specs=pl.BlockSpec((block_b, T, T), lambda i: (i, 0, 0)),
        ),
        compiler_params=pltpu.CompilerParams(
            dimension_semantics=("parallel",)),
    )(x, w, be, Ve)


def reference(x, U1, U2, U3, be, Ve):
    """Pure-JAX mirror of the PyTorch forward."""
    xp = jnp.transpose(x, (0, 3, 1, 2))                    # (B, T, N, F)
    lhs = jnp.matmul(jnp.matmul(xp, U1), U2)               # (B, T, N)
    rhs = jnp.matmul(U3, x)                                # (B, N, T)
    product = jnp.matmul(lhs, rhs)                         # (B, T, T)
    E = jnp.matmul(Ve, jax.nn.sigmoid(product + be))       # (B, T, T)
    return jax.nn.softmax(E, axis=1)


if __name__ == "__main__":
    B, N, F_in, C_out, T = 2, 16, 4, 8, 8

    key = jax.random.PRNGKey(0)
    k_x, k_u1, k_u2, k_u3, k_be, k_ve = jax.random.split(key, 6)

    x = jax.random.normal(k_x, (B, N, F_in, T), dtype=jnp.float32)
    # Deterministic synthetic parameters (torch.FloatTensor is uninitialized;
    # we use unit normals).
    U1 = jax.random.normal(k_u1, (F_in, C_out), dtype=jnp.float32)
    U2 = jax.random.normal(k_u2, (C_out,), dtype=jnp.float32)
    U3 = jax.random.normal(k_u3, (F_in,), dtype=jnp.float32)
    be = jax.random.normal(k_be, (1, T, T), dtype=jnp.float32)
    Ve = jax.random.normal(k_ve, (T, T), dtype=jnp.float32)

    out = jax.block_until_ready(temporal_attention(x, U1, U2, U3, be, Ve))
    ref = reference(x, U1, U2, U3, be, Ve)

    assert out.shape == (B, T, T) and out.dtype == jnp.float32
    # Slightly relaxed tolerance: pre-folding U1@U2 changes the fp summation
    # order vs. the (x@U1)@U2 reference.
    np.testing.assert_allclose(np.asarray(out), np.asarray(ref),
                               rtol=1e-4, atol=5e-5)
    print("KERNEL_OK")
</pallas_src>

<mosaic_0001>
module attributes {stable_mosaic.version = 11 : i64} {
  func.func @_temporal_attention_kernel(%arg0: i32, %arg1: memref<1x16x4x8xf32, #tpu.memory_space<vmem>>, %arg2: memref<2x4x1xf32, #tpu.memory_space<vmem>>, %arg3: memref<1x8x8xf32, #tpu.memory_space<vmem>>, %arg4: memref<8x8xf32, #tpu.memory_space<vmem>>, %arg5: memref<1x8x8xf32, #tpu.memory_space<vmem>>) attributes {dimension_semantics = [#tpu.dimension_semantics<parallel>], iteration_bounds = array<i64: 2>, scalar_prefetch = 0 : i64, scratch_operands = 0 : i64, tpu.core_type = #tpu.core_type<tc>, window_params = [{transform_indices = @transform_0, window_bounds = array<i64: 1, 16, 4, 8>}, {pipeline_mode = #tpu.pipeline_mode<synchronous>, transform_indices = @transform_1, window_bounds = array<i64: 2, 4, 1>}, {pipeline_mode = #tpu.pipeline_mode<synchronous>, transform_indices = @transform_2, window_bounds = array<i64: 1, 8, 8>}, {pipeline_mode = #tpu.pipeline_mode<synchronous>, transform_indices = @transform_3, window_bounds = array<i64: 8, 8>}, {transform_indices = @transform_4, window_bounds = array<i64: 1, 8, 8>}]} {
    %c0 = arith.constant 0 : index
    %c0_0 = arith.constant 0 : index
    %c0_1 = arith.constant 0 : index
    %c0_2 = arith.constant 0 : index
    %0 = vector.load %arg1[%c0, %c0_0, %c0_1, %c0_2] : memref<1x16x4x8xf32, #tpu.memory_space<vmem>>, vector<1x16x4x8xf32>
    %1 = vector.shape_cast %0 : vector<1x16x4x8xf32> to vector<16x4x8xf32>
    %c0_3 = arith.constant 0 : index
    %c0_4 = arith.constant 0 : index
    %c0_5 = arith.constant 0 : index
    %2 = vector.load %arg2[%c0_3, %c0_4, %c0_5] : memref<2x4x1xf32, #tpu.memory_space<vmem>>, vector<2x4x1xf32>
    %c0_6 = arith.constant 0 : index
    %c0_7 = arith.constant 0 : index
    %c0_8 = arith.constant 0 : index
    %3 = vector.load %arg3[%c0_6, %c0_7, %c0_8] : memref<1x8x8xf32, #tpu.memory_space<vmem>>, vector<1x8x8xf32>
    %c0_9 = arith.constant 0 : index
    %c0_10 = arith.constant 0 : index
    %4 = vector.load %arg4[%c0_9, %c0_10] : memref<8x8xf32, #tpu.memory_space<vmem>>, vector<8x8xf32>
    %5 = vector.extract_strided_slice %2 {offsets = [0, 0, 0], sizes = [1, 4, 1], strides = [1, 1, 1]} : vector<2x4x1xf32> to vector<1x4x1xf32>
    %6 = vector.shape_cast %5 : vector<1x4x1xf32> to vector<4x1xf32>
    %7 = vector.shape_cast %6 : vector<4x1xf32> to vector<1x4x1xf32>
    %8 = vector.extract_strided_slice %2 {offsets = [1, 0, 0], sizes = [1, 4, 1], strides = [1, 1, 1]} : vector<2x4x1xf32> to vector<1x4x1xf32>
    %9 = vector.shape_cast %8 : vector<1x4x1xf32> to vector<4x1xf32>
    %10 = vector.shape_cast %9 : vector<4x1xf32> to vector<1x4x1xf32>
    %11 = vector.broadcast %7 : vector<1x4x1xf32> to vector<16x4x8xf32>
    %12 = arith.mulf %1, %11 : vector<16x4x8xf32>
    %cst = arith.constant dense<0.000000e+00> : vector<16x8xf32>
    %13 = vector.multi_reduction <add>, %12, %cst [1] : vector<16x4x8xf32> to vector<16x8xf32>
    %14 = vector.shape_cast %13 : vector<16x8xf32> to vector<1x16x8xf32>
    %15 = vector.broadcast %10 : vector<1x4x1xf32> to vector<16x4x8xf32>
    %16 = arith.mulf %1, %15 : vector<16x4x8xf32>
    %cst_11 = arith.constant dense<0.000000e+00> : vector<16x8xf32>
    %17 = vector.multi_reduction <add>, %16, %cst_11 [1] : vector<16x4x8xf32> to vector<16x8xf32>
    %18 = vector.shape_cast %17 : vector<16x8xf32> to vector<1x16x8xf32>
    "tpu.trace_start"() <{level = 10 : i32, message = "bni,bnj->bij"}> : () -> ()
    %cst_12 = arith.constant dense<0.000000e+00> : vector<1x8x8xf32>
    %19 = tpu.matmul %14, %18, %cst_12 {dimension_numbers = #tpu.dot_dimension_numbers<[1], [1], [2], [2], [0, 0, 0, 2, 1, 2], [0], [0]>} : vector<1x16x8xf32>, vector<1x16x8xf32>, vector<1x8x8xf32> -> vector<1x8x8xf32>
    "tpu.trace_stop"() : () -> ()
    %20 = arith.addf %19, %3 : vector<1x8x8xf32>
    %21 = arith.negf %20 : vector<1x8x8xf32>
    %22 = math.exp %21 : vector<1x8x8xf32>
    %cst_13 = arith.constant 1.000000e+00 : f32
    %23 = vector.broadcast %cst_13 : f32 to vector<1x8x8xf32>
    %24 = arith.addf %23, %22 : vector<1x8x8xf32>
    %25 = arith.divf %23, %24 : vector<1x8x8xf32>
    %26 = vector.shape_cast %4 : vector<8x8xf32> to vector<1x8x8xf32>
    "tpu.trace_start"() <{level = 10 : i32, message = "bij,bjk->bik"}> : () -> ()
    %cst_14 = arith.constant dense<0.000000e+00> : vector<1x8x8xf32>
    %27 = tpu.matmul %26, %25, %cst_14 {dimension_numbers = #tpu.dot_dimension_numbers<[2], [1], [1], [2], [0, 0, 0, 1, 1, 2], [0], [0]>} : vector<1x8x8xf32>, vector<1x8x8xf32>, vector<1x8x8xf32> -> vector<1x8x8xf32>
    "tpu.trace_stop"() : () -> ()
    %cst_15 = arith.constant dense<0xFF800000> : vector<1x8xf32>
    %28 = vector.multi_reduction <maximumf>, %27, %cst_15 [1] : vector<1x8x8xf32> to vector<1x8xf32>
    %29 = vector.shape_cast %28 : vector<1x8xf32> to vector<1x1x8xf32>
    %30 = vector.broadcast %29 : vector<1x1x8xf32> to vector<1x8x8xf32>
    %31 = arith.subf %27, %30 : vector<1x8x8xf32>
    %32 = math.exp %31 : vector<1x8x8xf32>
    %cst_16 = arith.constant dense<0.000000e+00> : vector<1x8xf32>
    %33 = vector.multi_reduction <add>, %32, %cst_16 [1] : vector<1x8x8xf32> to vector<1x8xf32>
    %34 = vector.shape_cast %33 : vector<1x8xf32> to vector<1x1x8xf32>
    %35 = vector.broadcast %34 : vector<1x1x8xf32> to vector<1x8x8xf32>
    %36 = arith.divf %32, %35 : vector<1x8x8xf32>
    %c0_17 = arith.constant 0 : index
    %c0_18 = arith.constant 0 : index
    %c0_19 = arith.constant 0 : index
    %37 = vector.load %arg5[%c0_17, %c0_18, %c0_19] : memref<1x8x8xf32, #tpu.memory_space<vmem>>, vector<1x8x8xf32>
    tpu.vector_store %arg5[%c0_17, %c0_18, %c0_19], %36 {strides = array<i32>} : memref<1x8x8xf32, #tpu.memory_space<vmem>>, vector<1x8x8xf32>,
    return
  }
  func.func @transform_0(%arg0: i32) -> (i32, i32, i32, i32) {
    %c0_i32 = arith.constant 0 : i32
    %c0_i32_0 = arith.constant 0 : i32
    %c0_i32_1 = arith.constant 0 : i32
    %c0_i32_2 = arith.constant 0 : i32
    return %arg0, %c0_i32, %c0_i32_0, %c0_i32_1 : i32, i32, i32, i32
  }
  func.func @transform_1(%arg0: i32) -> (i32, i32, i32) {
    %c0_i32 = arith.constant 0 : i32
    %c0_i32_0 = arith.constant 0 : i32
    %c0_i32_1 = arith.constant 0 : i32
    %c0_i32_2 = arith.constant 0 : i32
    return %c0_i32, %c0_i32_0, %c0_i32_1 : i32, i32, i32
  }
  func.func @transform_2(%arg0: i32) -> (i32, i32, i32) {
    %c0_i32 = arith.constant 0 : i32
    %c0_i32_0 = arith.constant 0 : i32
    %c0_i32_1 = arith.constant 0 : i32
    %c0_i32_2 = arith.constant 0 : i32
    return %c0_i32, %c0_i32_0, %c0_i32_1 : i32, i32, i32
  }
  func.func @transform_3(%arg0: i32) -> (i32, i32) {
    %c0_i32 = arith.constant 0 : i32
    %c0_i32_0 = arith.constant 0 : i32
    %c0_i32_1 = arith.constant 0 : i32
    return %c0_i32, %c0_i32_0 : i32, i32
  }
  func.func @transform_4(%arg0: i32) -> (i32, i32, i32) {
    %c0_i32 = arith.constant 0 : i32
    %c0_i32_0 = arith.constant 0 : i32
    %c0_i32_1 = arith.constant 0 : i32
    return %arg0, %c0_i32, %c0_i32_0 : i32, i32, i32
  }
}

</mosaic_0001>

<llo_original>
// kernel: tpu_custom_call.1
$region0: #{tpu_custom_call.1}
  #allocation0 [shape = 'u32[]', space=smem, size = 0x4, offset = 0x4, fixed_abs, tag = 'smem constant byte address 0x4 - core index']
  #allocation1 [shape = 'u32[144,128]{1,0:T(1,128)}', space=vmem, size = 0x12000, scoped, tag = 'internal scratch']
  %s0 = inlined_call_operand.vmem [shape: f32[2,16,4,8], index: 0, kind: input, shape index: {}]
  %s1 = inlined_call_operand.vmem [shape: f32[2,4,1], index: 1, kind: input, shape index: {}]
  %s2 = inlined_call_operand.vmem [shape: f32[1,8,8], index: 2, kind: input, shape index: {}]
  %s3 = inlined_call_operand.vmem [shape: f32[8,8], index: 3, kind: input, shape index: {}]
  %s4 = inlined_call_operand.hbm [shape: f32[2,8,8], index: 4, kind: output, shape index: {}]
  %s5 = sld [smem:[#allocation0]]
  $region49: #{tpu_custom_call.1} parent=0
    _
  %s7 = ssub.s32 1, %s5
  %s8 = scalar_select 0, %s7, %s5
  $region1: #{tpu_custom_call.1} parent=0
    #allocation2 [shape = 'u8[8192]{0}', space=vmem, size = 0x2000, scoped, tag = 'output window, operand 0']
    #allocation3 [shape = 's32[2]{0}', space=sflag, size = 0x8, scoped, tag = 'scoped memory for tpu_custom_call.1']
    %9 = vsyncpa [#allocation3], 0
    %s10 = scalar_lea.sflag [#allocation3], 1
    %11 = vsyncpa %s10, 0
    loop: start=0, step=1, limit=4
    $region2: #{tpu_custom_call.1} parent=1 // loop_pre_header
      _
    $region3: #{tpu_custom_call.1} parent=1 // loop_header
      %s13 = sphi 0, %s17
      %p14 = scmp.ge.s32.totalorder %s13, 4
      %s23 = sphi 0, %s25
      %s26 = sphi 0, %s23
      %s27 = sphi 0, %s26
      %s43 = sphi 0, %s27
      %s47 = sphi 0, %s47
      %s49 = sphi 0, %s47
      %s50 = sphi 0, %s49
      %s64 = sphi 0, %s50
      %s68 = sphi 0, %s68
      %s70 = sphi 0, %s68
      %s71 = sphi 0, %s70
      %s85 = sphi 0, %s71
      %s89 = sphi 0, %s89
      %s91 = sphi 0, %s89
      %s92 = sphi 0, %s91
      %s106 = sphi 0, %s92
      %s112 = sphi 0, %s114
      %s115 = sphi 0, %s112
      %s116 = sphi 0, %s115
      %s132 = sphi 0, %s116
    $region4: #{tpu_custom_call.1} parent=1 // loop_header_branch
      %16 = sbr.rel (%p14) target = $region8
    $region5: #{tpu_custom_call.1} parent=1 // loop_body
      %s18 = ssub.s32 %s13, 1
      %s19 = ssub.s32 %s13, 2
      %s20 = sadd.s32 %s13, 1
      %s21 = ssub.s32 %s13, %s20
      %p22 = scmp.eq.s32.totalorder %s21, 0
      %s24 = sadd.s32 %s23, 1
      %s25 = scalar_select %p22, %s23, %s24
      %p28 = pneg %p22
      %p29 = scmp.eq.s32.totalorder %s13, 1
      %p30 = por %p28, %p29
      %p31 = scmp.ne.s32.totalorder %s23, %s26
      %p32 = scmp.eq.s32.totalorder %s13, 0
      %p33 = por %p31, %p32
      %p34 = scmp.ne.s32.totalorder %s23, %s26
      %p35 = scmp.eq.s32.totalorder %s18, 1
      %p36 = por %p34, %p35
      %p37 = scmp.ne.s32.totalorder %s26, %s27
      %p38 = scmp.eq.s32.totalorder %s18, 0
      %p39 = por %p37, %p38
      %p40 = scmp.ne.s32.totalorder %s26, %s27
      %p41 = scmp.eq.s32.totalorder %s19, 1
      %p42 = por %p40, %p41
      %p44 = scmp.ne.s32.totalorder %s27, %s43
      %p45 = scmp.eq.s32.totalorder %s19, 0
      %p46 = por %p44, %p45
      %s48 = sadd.s32 %s47, 1
      %p51 = scmp.eq.s32.totalorder %s13, 1
      %p52 = scmp.ne.s32.totalorder %s47, %s49
      %p53 = scmp.eq.s32.totalorder %s13, 0
      %p54 = por %p52, %p53
      %p55 = scmp.ne.s32.totalorder %s47, %s49
      %p56 = scmp.eq.s32.totalorder %s18, 1
      %p57 = por %p55, %p56
      %p58 = scmp.ne.s32.totalorder %s49, %s50
      %p59 = scmp.eq.s32.totalorder %s18, 0
      %p60 = por %p58, %p59
      %p61 = scmp.ne.s32.totalorder %s49, %s50
      %p62 = scmp.eq.s32.totalorder %s19, 1
      %p63 = por %p61, %p62
      %p65 = scmp.ne.s32.totalorder %s50, %s64
      %p66 = scmp.eq.s32.totalorder %s19, 0
      %p67 = por %p65, %p66
      %s69 = sadd.s32 %s68, 1
      %p72 = scmp.eq.s32.totalorder %s13, 1
      %p73 = scmp.ne.s32.totalorder %s68, %s70
      %p74 = scmp.eq.s32.totalorder %s13, 0
      %p75 = por %p73, %p74
      %p76 = scmp.ne.s32.totalorder %s68, %s70
      %p77 = scmp.eq.s32.totalorder %s18, 1
      %p78 = por %p76, %p77
      %p79 = scmp.ne.s32.totalorder %s70, %s71
      %p80 = scmp.eq.s32.totalorder %s18, 0
      %p81 = por %p79, %p80
      %p82 = scmp.ne.s32.totalorder %s70, %s71
      %p83 = scmp.eq.s32.totalorder %s19, 1
      %p84 = por %p82, %p83
      %p86 = scmp.ne.s32.totalorder %s71, %s85
      %p87 = scmp.eq.s32.totalorder %s19, 0
      %p88 = por %p86, %p87
      %s90 = sadd.s32 %s89, 1
      %p93 = scmp.eq.s32.totalorder %s13, 1
      %p94 = scmp.ne.s32.totalorder %s89, %s91
      %p95 = scmp.eq.s32.totalorder %s13, 0
      %p96 = por %p94, %p95
      %p97 = scmp.ne.s32.totalorder %s89, %s91
      %p98 = scmp.eq.s32.totalorder %s18, 1
      %p99 = por %p97, %p98
      %p100 = scmp.ne.s32.totalorder %s91, %s92
      %p101 = scmp.eq.s32.totalorder %s18, 0
      %p102 = por %p100, %p101
      %p103 = scmp.ne.s32.totalorder %s91, %s92
      %p104 = scmp.eq.s32.totalorder %s19, 1
      %p105 = por %p103, %p104
      %p107 = scmp.ne.s32.totalorder %s92, %s106
      %p108 = scmp.eq.s32.totalorder %s19, 0
      %p109 = por %p107, %p108
      %s110 = ssub.s32 %s13, %s20
      %p111 = scmp.eq.s32.totalorder %s110, 0
      %s113 = sadd.s32 %s112, 1
      %s114 = scalar_select %p111, %s112, %s113
      %p117 = pneg %p111
      %p118 = scmp.eq.s32.totalorder %s13, 1
      %p119 = por %p117, %p118
      %p120 = scmp.ne.s32.totalorder %s112, %s115
      %p121 = scmp.eq.s32.totalorder %s13, 0
      %p122 = por %p120, %p121
      %p123 = scmp.ne.s32.totalorder %s112, %s115
      %p124 = scmp.eq.s32.totalorder %s18, 1
      %p125 = por %p123, %p124
      %p126 = scmp.ne.s32.totalorder %s115, %s116
      %p127 = scmp.eq.s32.totalorder %s18, 0
      %p128 = por %p126, %p127
      %p129 = scmp.ne.s32.totalorder %s115, %s116
      %p130 = scmp.eq.s32.totalorder %s19, 1
      %p131 = por %p129, %p130
      %p133 = scmp.ne.s32.totalorder %s116, %s132
      %p134 = scmp.eq.s32.totalorder %s19, 0
      %p135 = por %p133, %p134
      %p136 = scmp.le.s32.totalorder 1, %s13
      %p137 = scmp.lt.s32.totalorder %s13, 3
      %p138 = pnand %p136, %p137
      %p139 = pneg %p138
      // Predicated region
      $region9: #{tpu_custom_call.1} parent=5 // pred_check
        _
      $region10: #{tpu_custom_call.1} parent=5 // pred_check_branch
        %141 = sbr.rel (%p138) target = $region12
      $region11: #{tpu_custom_call.1} parent=5 // pred_region
        %s142 = ssub.s32 %s13, 1
        // Predicated region
        $region13: #{tpu_custom_call.1} parent=11 // pred_check
          %p143 = pneg %p60
        $region14: #{tpu_custom_call.1} parent=11 // pred_check_branch
          %145 = sbr.rel (%p143) target = $region16
        $region15: #{tpu_custom_call.1} parent=11 // pred_region
          _
        $region16: #{tpu_custom_call.1} parent=11 // pred_fallthru
          _
        // Predicated region
        $region17: #{tpu_custom_call.1} parent=11 // pred_check
          %p146 = pneg %p81
        $region18: #{tpu_custom_call.1} parent=11 // pred_check_branch
          %148 = sbr.rel (%p146) target = $region20
        $region19: #{tpu_custom_call.1} parent=11 // pred_region
          _
        $region20: #{tpu_custom_call.1} parent=11 // pred_fallthru
          _
        // Predicated region
        $region21: #{tpu_custom_call.1} parent=11 // pred_check
          %p149 = pneg %p102
        $region22: #{tpu_custom_call.1} parent=11 // pred_check_branch
          %151 = sbr.rel (%p149) target = $region24
        $region23: #{tpu_custom_call.1} parent=11 // pred_region
          _
        $region24: #{tpu_custom_call.1} parent=11 // pred_fallthru
          _
      $region12: #{tpu_custom_call.1} parent=5 // pred_fallthru
        _
      %p152 = scmp.lt.s32.totalorder %s13, 2
      // Predicated region
      $region25: #{tpu_custom_call.1} parent=5 // pred_check
        %p153 = pneg %p152
      $region26: #{tpu_custom_call.1} parent=5 // pred_check_branch
        %155 = sbr.rel (%p153) target = $region28
      $region27: #{tpu_custom_call.1} parent=5 // pred_region
        // Predicated region
        $region29: #{tpu_custom_call.1} parent=27 // pred_check
          %p156 = pneg %p33
        $region30: #{tpu_custom_call.1} parent=27 // pred_check_branch
          %158 = sbr.rel (%p156) target = $region32
        $region31: #{tpu_custom_call.1} parent=27 // pred_region
          %p159 = scmp.lt.s32.totalorder %s13, 1
          %s160 = scalar_select %p159, %s13, 1
          %s161 = smul.addr %s160, 16
          %s162 = smul.addr %s161, 4
          %s163 = scalar_lea.vmem %s0, %s162
        $region32: #{tpu_custom_call.1} parent=27 // pred_fallthru
          _
      $region28: #{tpu_custom_call.1} parent=5 // pred_fallthru
        _
      %p164 = scmp.le.s32.totalorder 1, %s13
      %p165 = scmp.lt.s32.totalorder %s13, 3
      %p166 = pnand %p164, %p165
      %p167 = pneg %p166
      // Predicated region
      $region33: #{tpu_custom_call.1} parent=5 // pred_check
        _
      $region34: #{tpu_custom_call.1} parent=5 // pred_check_branch
        %169 = sbr.rel (%p166) target = $region36
      $region35: #{tpu_custom_call.1} parent=5 // pred_region
        %s170 = ssub.s32 %s13, 1
        %p171 = scmp.lt.s32.totalorder %s18, 1
        %s172 = scalar_select %p171, %s18, 1
        %s173 = smul.addr %s172, 16
        %s174 = smul.addr %s173, 4
        %s175 = scalar_lea.vmem %s0, %s174
        %p176 = pneg %p39
        %p177 = pneg %p36
        %p178 = pneg %p60
        %p179 = pneg %p57
        %p180 = pneg %p81
        %p181 = pneg %p78
        %p182 = pneg %p102
        %p183 = pneg %p99
        %p184 = pneg %p128
        %p185 = pneg %p125
        %s186 = sand.u32 %s115, 1
        %s187 = scalar_lea.sflag [#allocation3], %s186
        %s188 = sand.u32 %s115, 1
        %s189 = smul.addr %s188, 8
        %s190 = scalar_lea.vmem [#allocation2], %s189
        %p191 = scmp.lt.s32.totalorder %s18, 1
        %s192 = scalar_select %p191, %s18, 1
        %s193 = smul.addr %s192, 16
        %s194 = smul.addr %s193, 4
        %s195 = scalar_lea.vmem %s0, %s194
        %v196 = vld [vmem:[%s195] sm:$0xf]
        %v197 = vld [vmem:[%s195 + $0x4] sm:$0xf]
        %v198 = vld [vmem:[%s195 + $0x8] sm:$0xf]
        %v199 = vld [vmem:[%s195 + $0xc] sm:$0xf]
        %v200 = vld [vmem:[%s195 + $0x10] sm:$0xf]
        %v201 = vld [vmem:[%s195 + $0x14] sm:$0xf]
        %v202 = vld [vmem:[%s195 + $0x18] sm:$0xf]
        %v203 = vld [vmem:[%s195 + $0x1c] sm:$0xf]
        %v204 = vld [vmem:[%s195 + $0x20] sm:$0xf]
        %v205 = vld [vmem:[%s195 + $0x24] sm:$0xf]
        %v206 = vld [vmem:[%s195 + $0x28] sm:$0xf]
        %v207 = vld [vmem:[%s195 + $0x2c] sm:$0xf]
        %v208 = vld [vmem:[%s195 + $0x30] sm:$0xf]
        %v209 = vld [vmem:[%s195 + $0x34] sm:$0xf]
        %v210 = vld [vmem:[%s195 + $0x38] sm:$0xf]
        %v211 = vld [vmem:[%s195 + $0x3c] sm:$0xf]
        %v212 = vld [vmem:[%s1] sm:$0xf]
        %v213 = vld [vmem:[%s1 + $0x4] sm:$0xf]
        %v214 = vld [vmem:[%s2] sm:$0xff]
        %v215 = vld [vmem:[%s3] sm:$0xff]
        %217 = vset.pattern.permute.xlu0 0
        %218 = vperm.xlu0 %217, %v212
        %v219 = vpop.permute.xlu0 %218
        %v221 = vmul.f32 %v196, %v219
        %v222 = vmul.f32 %v197, %v219
        %v223 = vmul.f32 %v198, %v219
        %v224 = vmul.f32 %v199, %v219
        %v225 = vmul.f32 %v200, %v219
        %v226 = vmul.f32 %v201, %v219
        %v227 = vmul.f32 %v202, %v219
        %v228 = vmul.f32 %v203, %v219
        %v229 = vmul.f32 %v204, %v219
        %v230 = vmul.f32 %v205, %v219
        %v231 = vmul.f32 %v206, %v219
        %v232 = vmul.f32 %v207, %v219
        %v233 = vmul.f32 %v208, %v219
        %v234 = vmul.f32 %v209, %v219
        %v235 = vmul.f32 %v210, %v219
        %v236 = vmul.f32 %v211, %v219
        %vm237 = vcmask 60416
        %v238 = vsel %vm237, %v221, 0.0
        %v239 = vrot.slane %v238, 4
        %v240 = vadd.f32 %v238, %v239
        %v241 = vrot.slane %v240, 2
        %v242 = vadd.f32 %v240, %v241
        %v243 = vrot.slane %v242, 1
        %v244 = vadd.f32 %v242, %v243
        %v245 = vsel %vm237, %v222, 0.0
        %v246 = vrot.slane %v245, 4
        %v247 = vadd.f32 %v245, %v246
        %v248 = vrot.slane %v247, 2
        %v249 = vadd.f32 %v247, %v248
        %v250 = vrot.slane %v249, 1
        %v251 = vadd.f32 %v249, %v250
        %v252 = vsel %vm237, %v223, 0.0
        %v253 = vrot.slane %v252, 4
        %v254 = vadd.f32 %v252, %v253
        %v255 = vrot.slane %v254, 2
        %v256 = vadd.f32 %v254, %v255
        %v257 = vrot.slane %v256, 1
        %v258 = vadd.f32 %v256, %v257
        %v259 = vsel %vm237, %v224, 0.0
        %v260 = vrot.slane %v259, 4
        %v261 = vadd.f32 %v259, %v260
        %v262 = vrot.slane %v261, 2
        %v263 = vadd.f32 %v261, %v262
        %v264 = vrot.slane %v263, 1
        %v265 = vadd.f32 %v263, %v264
        %v266 = vsel %vm237, %v225, 0.0
        %v267 = vrot.slane %v266, 4
        %v268 = vadd.f32 %v266, %v267
        %v269 = vrot.slane %v268, 2
        %v270 = vadd.f32 %v268, %v269
        %v271 = vrot.slane %v270, 1
        %v272 = vadd.f32 %v270, %v271
        %v273 = vsel %vm237, %v226, 0.0
        %v274 = vrot.slane %v273, 4
        %v275 = vadd.f32 %v273, %v274
        %v276 = vrot.slane %v275, 2
        %v277 = vadd.f32 %v275, %v276
        %v278 = vrot.slane %v277, 1
        %v279 = vadd.f32 %v277, %v278
        %v280 = vsel %vm237, %v227, 0.0
        %v281 = vrot.slane %v280, 4
        %v282 = vadd.f32 %v280, %v281
        %v283 = vrot.slane %v282, 2
        %v284 = vadd.f32 %v282, %v283
        %v285 = vrot.slane %v284, 1
        %v286 = vadd.f32 %v284, %v285
        %v287 = vsel %vm237, %v228, 0.0
        %v288 = vrot.slane %v287, 4
        %v289 = vadd.f32 %v287, %v288
        %v290 = vrot.slane %v289, 2
        %v291 = vadd.f32 %v289, %v290
        %v292 = vrot.slane %v291, 1
        %v293 = vadd.f32 %v291, %v292
        %v294 = vsel %vm237, %v229, 0.0
        %v295 = vrot.slane %v294, 4
        %v296 = vadd.f32 %v294, %v295
        %v297 = vrot.slane %v296, 2
        %v298 = vadd.f32 %v296, %v297
        %v299 = vrot.slane %v298, 1
        %v300 = vadd.f32 %v298, %v299
        %v301 = vsel %vm237, %v230, 0.0
        %v302 = vrot.slane %v301, 4
        %v303 = vadd.f32 %v301, %v302
        %v304 = vrot.slane %v303, 2
        %v305 = vadd.f32 %v303, %v304
        %v306 = vrot.slane %v305, 1
        %v307 = vadd.f32 %v305, %v306
        %v308 = vsel %vm237, %v231, 0.0
        %v309 = vrot.slane %v308, 4
        %v310 = vadd.f32 %v308, %v309
        %v311 = vrot.slane %v310, 2
        %v312 = vadd.f32 %v310, %v311
        %v313 = vrot.slane %v312, 1
        %v314 = vadd.f32 %v312, %v313
        %v315 = vsel %vm237, %v232, 0.0
        %v316 = vrot.slane %v315, 4
        %v317 = vadd.f32 %v315, %v316
        %v318 = vrot.slane %v317, 2
        %v319 = vadd.f32 %v317, %v318
        %v320 = vrot.slane %v319, 1
        %v321 = vadd.f32 %v319, %v320
        %v322 = vsel %vm237, %v233, 0.0
        %v323 = vrot.slane %v322, 4
        %v324 = vadd.f32 %v322, %v323
        %v325 = vrot.slane %v324, 2
        %v326 = vadd.f32 %v324, %v325
        %v327 = vrot.slane %v326, 1
        %v328 = vadd.f32 %v326, %v327
        %v329 = vsel %vm237, %v234, 0.0
        %v330 = vrot.slane %v329, 4
        %v331 = vadd.f32 %v329, %v330
        %v332 = vrot.slane %v331, 2
        %v333 = vadd.f32 %v331, %v332
        %v334 = vrot.slane %v333, 1
        %v335 = vadd.f32 %v333, %v334
        %v336 = vsel %vm237, %v235, 0.0
        %v337 = vrot.slane %v336, 4
        %v338 = vadd.f32 %v336, %v337
        %v339 = vrot.slane %v338, 2
        %v340 = vadd.f32 %v338, %v339
        %v341 = vrot.slane %v340, 1
        %v342 = vadd.f32 %v340, %v341
        %v343 = vsel %vm237, %v236, 0.0
        %v344 = vrot.slane %v343, 4
        %v345 = vadd.f32 %v343, %v344
        %v346 = vrot.slane %v345, 2
        %v347 = vadd.f32 %v345, %v346
        %v348 = vrot.slane %v347, 1
        %v349 = vadd.f32 %v347, %v348
        %351 = vset.pattern.permute.xlu0 0
        %352 = vperm.xlu0 %351, %v213
        %v353 = vpop.permute.xlu0 %352
        %v355 = vmul.f32 %v196, %v353
        %v356 = vmul.f32 %v197, %v353
        %v357 = vmul.f32 %v198, %v353
        %v358 = vmul.f32 %v199, %v353
        %v359 = vmul.f32 %v200, %v353
        %v360 = vmul.f32 %v201, %v353
        %v361 = vmul.f32 %v202, %v353
        %v362 = vmul.f32 %v203, %v353
        %v363 = vmul.f32 %v204, %v353
        %v364 = vmul.f32 %v205, %v353
        %v365 = vmul.f32 %v206, %v353
        %v366 = vmul.f32 %v207, %v353
        %v367 = vmul.f32 %v208, %v353
        %v368 = vmul.f32 %v209, %v353
        %v369 = vmul.f32 %v210, %v353
        %v370 = vmul.f32 %v211, %v353
        %v371 = vsel %vm237, %v355, 0.0
        %v372 = vrot.slane %v371, 4
        %v373 = vadd.f32 %v371, %v372
        %v374 = vrot.slane %v373, 2
        %v375 = vadd.f32 %v373, %v374
        %v376 = vrot.slane %v375, 1
        %v377 = vadd.f32 %v375, %v376
        %v378 = vsel %vm237, %v356, 0.0
        %v379 = vrot.slane %v378, 4
        %v380 = vadd.f32 %v378, %v379
        %v381 = vrot.slane %v380, 2
        %v382 = vadd.f32 %v380, %v381
        %v383 = vrot.slane %v382, 1
        %v384 = vadd.f32 %v382, %v383
        %v385 = vsel %vm237, %v357, 0.0
        %v386 = vrot.slane %v385, 4
        %v387 = vadd.f32 %v385, %v386
        %v388 = vrot.slane %v387, 2
        %v389 = vadd.f32 %v387, %v388
        %v390 = vrot.slane %v389, 1
        %v391 = vadd.f32 %v389, %v390
        %v392 = vsel %vm237, %v358, 0.0
        %v393 = vrot.slane %v392, 4
        %v394 = vadd.f32 %v392, %v393
        %v395 = vrot.slane %v394, 2
        %v396 = vadd.f32 %v394, %v395
        %v397 = vrot.slane %v396, 1
        %v398 = vadd.f32 %v396, %v397
        %v399 = vsel %vm237, %v359, 0.0
        %v400 = vrot.slane %v399, 4
        %v401 = vadd.f32 %v399, %v400
        %v402 = vrot.slane %v401, 2
        %v403 = vadd.f32 %v401, %v402
        %v404 = vrot.slane %v403, 1
        %v405 = vadd.f32 %v403, %v404
        %v406 = vsel %vm237, %v360, 0.0
        %v407 = vrot.slane %v406, 4
        %v408 = vadd.f32 %v406, %v407
        %v409 = vrot.slane %v408, 2
        %v410 = vadd.f32 %v408, %v409
        %v411 = vrot.slane %v410, 1
        %v412 = vadd.f32 %v410, %v411
        %v413 = vsel %vm237, %v361, 0.0
        %v414 = vrot.slane %v413, 4
        %v415 = vadd.f32 %v413, %v414
        %v416 = vrot.slane %v415, 2
        %v417 = vadd.f32 %v415, %v416
        %v418 = vrot.slane %v417, 1
        %v419 = vadd.f32 %v417, %v418
        %v420 = vsel %vm237, %v362, 0.0
        %v421 = vrot.slane %v420, 4
        %v422 = vadd.f32 %v420, %v421
        %v423 = vrot.slane %v422, 2
        %v424 = vadd.f32 %v422, %v423
        %v425 = vrot.slane %v424, 1
        %v426 = vadd.f32 %v424, %v425
        %v427 = vsel %vm237, %v363, 0.0
        %v428 = vrot.slane %v427, 4
        %v429 = vadd.f32 %v427, %v428
        %v430 = vrot.slane %v429, 2
        %v431 = vadd.f32 %v429, %v430
        %v432 = vrot.slane %v431, 1
        %v433 = vadd.f32 %v431, %v432
        %v434 = vsel %vm237, %v364, 0.0
        %v435 = vrot.slane %v434, 4
        %v436 = vadd.f32 %v434, %v435
        %v437 = vrot.slane %v436, 2
        %v438 = vadd.f32 %v436, %v437
        %v439 = vrot.slane %v438, 1
        %v440 = vadd.f32 %v438, %v439
        %v441 = vsel %vm237, %v365, 0.0
        %v442 = vrot.slane %v441, 4
        %v443 = vadd.f32 %v441, %v442
        %v444 = vrot.slane %v443, 2
        %v445 = vadd.f32 %v443, %v444
        %v446 = vrot.slane %v445, 1
        %v447 = vadd.f32 %v445, %v446
        %v448 = vsel %vm237, %v366, 0.0
        %v449 = vrot.slane %v448, 4
        %v450 = vadd.f32 %v448, %v449
        %v451 = vrot.slane %v450, 2
        %v452 = vadd.f32 %v450, %v451
        %v453 = vrot.slane %v452, 1
        %v454 = vadd.f32 %v452, %v453
        %v455 = vsel %vm237, %v367, 0.0
        %v456 = vrot.slane %v455, 4
        %v457 = vadd.f32 %v455, %v456
        %v458 = vrot.slane %v457, 2
        %v459 = vadd.f32 %v457, %v458
        %v460 = vrot.slane %v459, 1
        %v461 = vadd.f32 %v459, %v460
        %v462 = vsel %vm237, %v368, 0.0
        %v463 = vrot.slane %v462, 4
        %v464 = vadd.f32 %v462, %v463
        %v465 = vrot.slane %v464, 2
        %v466 = vadd.f32 %v464, %v465
        %v467 = vrot.slane %v466, 1
        %v468 = vadd.f32 %v466, %v467
        %v469 = vsel %vm237, %v369, 0.0
        %v470 = vrot.slane %v469, 4
        %v471 = vadd.f32 %v469, %v470
        %v472 = vrot.slane %v471, 2
        %v473 = vadd.f32 %v471, %v472
        %v474 = vrot.slane %v473, 1
        %v475 = vadd.f32 %v473, %v474
        %v476 = vsel %vm237, %v370, 0.0
        %v477 = vrot.slane %v476, 4
        %v478 = vadd.f32 %v476, %v477
        %v479 = vrot.slane %v478, 2
        %v480 = vadd.f32 %v478, %v479
        %v481 = vrot.slane %v480, 1
        %v482 = vadd.f32 %v480, %v481
        %vm499 = vcmask 1041409
        %v500 = vsel %vm499, %v251, %v244
        %vm501 = vcmask 1042434
        %v502 = vsel %vm501, %v258, %v500
        %vm503 = vcmask 1043459
        %v504 = vsel %vm503, %v265, %v502
        %vm505 = vcmask 1044484
        %v506 = vsel %vm505, %v272, %v504
        %vm507 = vcmask 1045509
        %v508 = vsel %vm507, %v279, %v506
        %vm509 = vcmask 1046534
        %v510 = vsel %vm509, %v286, %v508
        %vm511 = vcmask 1047559
        %v512 = vsel %vm511, %v293, %v510
        %v513 = vsel %vm499, %v307, %v300
        %v514 = vsel %vm501, %v314, %v513
        %v515 = vsel %vm503, %v321, %v514
        %v516 = vsel %vm505, %v328, %v515
        %v517 = vsel %vm507, %v335, %v516
        %v518 = vsel %vm509, %v342, %v517
        %v519 = vsel %vm511, %v349, %v518
        %522 = vxpose.xlu0.b32.start [1/16] %v512, 128
        %523 = vxpose.xlu0.b32.cont [2/16] %v519, 128
        %524 = vxpose.xlu0.b32.cont [3/16] 0.0, 128
        %525 = vxpose.xlu0.b32.cont [4/16] 0.0, 128
        %526 = vxpose.xlu0.b32.cont [5/16] 0.0, 128
        %527 = vxpose.xlu0.b32.cont [6/16] 0.0, 128
        %528 = vxpose.xlu0.b32.cont [7/16] 0.0, 128
        %529 = vxpose.xlu0.b32.cont [8/16] 0.0, 128
        %530 = vxpose.xlu0.b32.cont [9/16] 0.0, 128
        %531 = vxpose.xlu0.b32.cont [10/16] 0.0, 128
        %532 = vxpose.xlu0.b32.cont [11/16] 0.0, 128
        %533 = vxpose.xlu0.b32.cont [12/16] 0.0, 128
        %534 = vxpose.xlu0.b32.cont [13/16] 0.0, 128
        %535 = vxpose.xlu0.b32.cont [14/16] 0.0, 128
        %536 = vxpose.xlu0.b32.cont [15/16] 0.0, 128
        %537 = vxpose.xlu0.b32.end [16/16] 0.0, 128
        %v538 = vpop.trf.xlu0
        %v539 = vpop.trf.xlu0
        %v540 = vpop.trf.xlu0
        %v541 = vpop.trf.xlu0
        %v542 = vpop.trf.xlu0
        %v543 = vpop.trf.xlu0
        %v544 = vpop.trf.xlu0
        %v545 = vpop.trf.xlu0
        %v546 = vpop.trf.xlu0
        %v547 = vpop.trf.xlu0
        %v548 = vpop.trf.xlu0
        %v549 = vpop.trf.xlu0
        %v550 = vpop.trf.xlu0
        %v551 = vpop.trf.xlu0
        %v552 = vpop.trf.xlu0
        %v553 = vpop.trf.xlu0
        %v570 = vsel %vm499, %v384, %v377
        %v571 = vsel %vm501, %v391, %v570
        %v572 = vsel %vm503, %v398, %v571
        %v573 = vsel %vm505, %v405, %v572
        %v574 = vsel %vm507, %v412, %v573
        %v575 = vsel %vm509, %v419, %v574
        %v576 = vsel %vm511, %v426, %v575
        %v577 = vsel %vm499, %v440, %v433
        %v578 = vsel %vm501, %v447, %v577
        %v579 = vsel %vm503, %v454, %v578
        %v580 = vsel %vm505, %v461, %v579
        %v581 = vsel %vm507, %v468, %v580
        %v582 = vsel %vm509, %v475, %v581
        %v583 = vsel %vm511, %v482, %v582
        %vm586 = vcmask 130048
        %v588 = vsel %vm586, %v538, 0
        %590 = vmatprep.subr.mxu0 0.0
        %591 = vmatpush1.msra.mxu0 %v576
        %592 = vmatprep.subr.mxu0 0.0
        %593 = vmatpush1.msra.mxu0 %v583
        %594 = vmatprep.subr.mxu0 0.0
        %595 = vmatpush1.msra.mxu0 0.0
        %596 = vmatprep.subr.mxu0 0.0
        %597 = vmatpush1.msra.mxu0 0.0
        %598 = vmatprep.subr.mxu0 0.0
        %599 = vmatpush1.msra.mxu0 0.0
        %600 = vmatprep.subr.mxu0 0.0
        %601 = vmatpush1.msra.mxu0 0.0
        %602 = vmatprep.subr.mxu0 0.0
        %603 = vmatpush1.msra.mxu0 0.0
        %604 = vmatprep.subr.mxu0 0.0
        %605 = vmatpush1.msra.mxu0 0.0
        %606 = vmatprep.subr.mxu0 0.0
        %607 = vmatpush1.msra.mxu0 0.0
        %608 = vmatprep.subr.mxu0 0.0
        %609 = vmatpush1.msra.mxu0 0.0
        %610 = vmatprep.subr.mxu0 0.0
        %611 = vmatpush1.msra.mxu0 0.0
        %612 = vmatprep.subr.mxu0 0.0
        %613 = vmatpush1.msra.mxu0 0.0
        %614 = vmatprep.subr.mxu0 0.0
        %615 = vmatpush1.msra.mxu0 0.0
        %616 = vmatprep.subr.mxu0 0.0
        %617 = vmatpush1.msra.mxu0 0.0
        %618 = vmatprep.subr.mxu0 0.0
        %619 = vmatpush1.msra.mxu0 0.0
        %620 = vmatprep.subr.mxu0 0.0
        %621 = vmatpush1.msra.mxu0 0.0
        %622 = vmatprep.subr.mxu0 0.0
        %623 = vmatpush1.msra.mxu0 0.0
        %624 = vmatprep.subr.mxu0 0.0
        %625 = vmatpush1.msra.mxu0 0.0
        %626 = vmatprep.subr.mxu0 0.0
        %627 = vmatpush1.msra.mxu0 0.0
        %628 = vmatprep.subr.mxu0 0.0
        %629 = vmatpush1.msra.mxu0 0.0
        %630 = vmatprep.subr.mxu0 0.0
        %631 = vmatpush1.msra.mxu0 0.0
        %632 = vmatprep.subr.mxu0 0.0
        %633 = vmatpush1.msra.mxu0 0.0
        %634 = vmatprep.subr.mxu0 0.0
        %635 = vmatpush1.msra.mxu0 0.0
        %636 = vmatprep.subr.mxu0 0.0
        %637 = vmatpush1.msra.mxu0 0.0
        %638 = vmatprep.subr.mxu0 0.0
        %639 = vmatpush1.msra.mxu0 0.0
        %640 = vmatprep.subr.mxu0 0.0
        %641 = vmatpush1.msra.mxu0 0.0
        %642 = vmatprep.subr.mxu0 0.0
        %643 = vmatpush1.msra.mxu0 0.0
        %644 = vmatprep.subr.mxu0 0.0
        %645 = vmatpush1.msra.mxu0 0.0
        %646 = vmatprep.subr.mxu0 0.0
        %647 = vmatpush1.msra.mxu0 0.0
        %648 = vmatprep.subr.mxu0 0.0
        %649 = vmatpush1.msra.mxu0 0.0
        %650 = vmatprep.subr.mxu0 0.0
        %651 = vmatpush1.msra.mxu0 0.0
        %652 = vmatprep.subr.mxu0 0.0
        %653 = vmatpush1.msra.mxu0 0.0
        %654 = vmatprep.mubr.f32.mxu0 0.0
        %655 = vmatmul.mubr.f32.gmra.mrb[0].mxu0 %v588
        %v656 = vpop.f32.mrb[0].mxu0
        %v657 = vadd.f32 %v214, %v656
        %v658 = vpop.f32.mrb[0].mxu0
        %659 = vdwg.mxu0
        %v660 = vxor.u32 %v657, 2147483648
        %v661 = vmul.f32 %v660, 1.442695
        %v662 = vpow.pop %v661
        %v663 = vadd.f32 %v662, 1.0
        %v664 = vrcp.pop %v663
        %v665 = vmul.f32 1.0, %v664
        %vm666 = vcmask 64512
        %v668 = vsel %vm666, %v215, 0
        %670 = vmatprep.subr.mxu0 0.0
        %671 = vmatpush1.msra.mxu0 %v665
        %672 = vmatprep.subr.mxu0 0.0
        %673 = vmatpush1.msra.mxu0 0.0
        %674 = vmatprep.subr.mxu0 0.0
        %675 = vmatpush1.msra.mxu0 0.0
        %676 = vmatprep.subr.mxu0 0.0
        %677 = vmatpush1.msra.mxu0 0.0
        %678 = vmatprep.subr.mxu0 0.0
        %679 = vmatpush1.msra.mxu0 0.0
        %680 = vmatprep.subr.mxu0 0.0
        %681 = vmatpush1.msra.mxu0 0.0
        %682 = vmatprep.subr.mxu0 0.0
        %683 = vmatpush1.msra.mxu0 0.0
        %684 = vmatprep.subr.mxu0 0.0
        %685 = vmatpush1.msra.mxu0 0.0
        %686 = vmatprep.subr.mxu0 0.0
        %687 = vmatpush1.msra.mxu0 0.0
        %688 = vmatprep.subr.mxu0 0.0
        %689 = vmatpush1.msra.mxu0 0.0
        %690 = vmatprep.subr.mxu0 0.0
        %691 = vmatpush1.msra.mxu0 0.0
        %692 = vmatprep.subr.mxu0 0.0
        %693 = vmatpush1.msra.mxu0 0.0
        %694 = vmatprep.subr.mxu0 0.0
        %695 = vmatpush1.msra.mxu0 0.0
        %696 = vmatprep.subr.mxu0 0.0
        %697 = vmatpush1.msra.mxu0 0.0
        %698 = vmatprep.subr.mxu0 0.0
        %699 = vmatpush1.msra.mxu0 0.0
        %700 = vmatprep.subr.mxu0 0.0
        %701 = vmatpush1.msra.mxu0 0.0
        %702 = vmatprep.subr.mxu0 0.0
        %703 = vmatpush1.msra.mxu0 0.0
        %704 = vmatprep.subr.mxu0 0.0
        %705 = vmatpush1.msra.mxu0 0.0
        %706 = vmatprep.subr.mxu0 0.0
        %707 = vmatpush1.msra.mxu0 0.0
        %708 = vmatprep.subr.mxu0 0.0
        %709 = vmatpush1.msra.mxu0 0.0
        %710 = vmatprep.subr.mxu0 0.0
        %711 = vmatpush1.msra.mxu0 0.0
        %712 = vmatprep.subr.mxu0 0.0
        %713 = vmatpush1.msra.mxu0 0.0
        %714 = vmatprep.subr.mxu0 0.0
        %715 = vmatpush1.msra.mxu0 0.0
        %716 = vmatprep.subr.mxu0 0.0
        %717 = vmatpush1.msra.mxu0 0.0
        %718 = vmatprep.subr.mxu0 0.0
        %719 = vmatpush1.msra.mxu0 0.0
        %720 = vmatprep.subr.mxu0 0.0
        %721 = vmatpush1.msra.mxu0 0.0
        %722 = vmatprep.subr.mxu0 0.0
        %723 = vmatpush1.msra.mxu0 0.0
        %724 = vmatprep.subr.mxu0 0.0
        %725 = vmatpush1.msra.mxu0 0.0
        %726 = vmatprep.subr.mxu0 0.0
        %727 = vmatpush1.msra.mxu0 0.0
        %728 = vmatprep.subr.mxu0 0.0
        %729 = vmatpush1.msra.mxu0 0.0
        %730 = vmatprep.subr.mxu0 0.0
        %731 = vmatpush1.msra.mxu0 0.0
        %732 = vmatprep.subr.mxu0 0.0
        %733 = vmatpush1.msra.mxu0 0.0
        %734 = vmatprep.mubr.f32.mxu0 0.0
        %735 = vmatmul.mubr.f32.gmra.mrb[0].mxu0 %v668
        %v736 = vpop.f32.mrb[0].mxu0
        %v737 = vadd.f32 0.0, %v736
        %v738 = vpop.f32.mrb[0].mxu0
        %739 = vdwg.mxu0
        %v740 = vsel %vm666, %v737, -inf
        %v741 = vrot.slane %v740, 4
        %v742 = vmax.f32 %v740, %v741
        %v743 = vrot.slane %v742, 2
        %v744 = vmax.f32 %v742, %v743
        %v745 = vrot.slane %v744, 1
        %v746 = vmax.f32 %v744, %v745
        %v747 = vsub.f32 %v737, %v746
        %v748 = vmul.f32 %v747, 1.442695
        %v749 = vpow.pop %v748
        %v750 = vsel %vm666, %v749, 0.0
        %v751 = vrot.slane %v750, 4
        %v752 = vadd.f32 %v750, %v751
        %v753 = vrot.slane %v752, 2
        %v754 = vadd.f32 %v752, %v753
        %v755 = vrot.slane %v754, 1
        %v756 = vadd.f32 %v754, %v755
        %v757 = vrcp.pop %v756
        %v758 = vmul.f32 %v749, %v757
        %759 = vst.msk [vmem:[%s190] sm:$0xff] %vm666, %v758
        %s760 = sand.u32 %s115, 1
        %s761 = scalar_lea.sflag [#allocation3], %s760
        %s762 = sand.u32 %s115, 1
        %s763 = smul.addr %s762, 8
        %s764 = scalar_lea.vmem [#allocation2], %s763
        // Predicated region
        $region37: #{tpu_custom_call.1} parent=35 // pred_check
          %p765 = pneg %p125
        $region38: #{tpu_custom_call.1} parent=35 // pred_check_branch
          %767 = sbr.rel (%p765) target = $region40
        $region39: #{tpu_custom_call.1} parent=35 // pred_region
          %s769 = ssub.s32 128, 128
          %770 = vsyncadd %s761, %s769
          %s771 = smul.addr %s18, 128
          %s772 = scalar_lea.hbm %s4, %s771
          %s774 = sshll.u32 %s764, 4
          %s775 = int_to_ptr.vmem [resolvable:$true] %s774
          %777 = dma.vmem_to_hbm [thread:$0]  %s775, 128, %s772, %s761
        $region40: #{tpu_custom_call.1} parent=35 // pred_fallthru
          _
      $region36: #{tpu_custom_call.1} parent=5 // pred_fallthru
        _
      %p778 = scmp.le.s32.totalorder 2, %s13
      // Predicated region
      $region41: #{tpu_custom_call.1} parent=5 // pred_check
        %p779 = pneg %p778
      $region42: #{tpu_custom_call.1} parent=5 // pred_check_branch
        %781 = sbr.rel (%p779) target = $region44
      $region43: #{tpu_custom_call.1} parent=5 // pred_region
        %s782 = ssub.s32 %s13, 2
        // Predicated region
        $region45: #{tpu_custom_call.1} parent=43 // pred_check
          %p783 = pneg %p131
        $region46: #{tpu_custom_call.1} parent=43 // pred_check_branch
          %785 = sbr.rel (%p783) target = $region48
        $region47: #{tpu_custom_call.1} parent=43 // pred_region
          %s786 = sand.u32 %s116, 1
          %s787 = scalar_lea.sflag [#allocation3], %s786
          %s788 = sand.u32 %s116, 1
          %s789 = smul.addr %s788, 8
          %s790 = scalar_lea.vmem [#allocation2], %s789
          %791 = dma.done %s787, 128
        $region48: #{tpu_custom_call.1} parent=43 // pred_fallthru
          _
      $region44: #{tpu_custom_call.1} parent=5 // pred_fallthru
        _
    $region6: #{tpu_custom_call.1} parent=1 // loop_footer
      %s17 = sadd.s32 1, %s13
    $region7: #{tpu_custom_call.1} parent=1 // loop_footer_branch
      %12 = sbr.rel target = $region3
    $region8: #{tpu_custom_call.1} parent=1 // loop_exit
      _
    %792 = vsyncpa [#allocation3], 1
    %s793 = scalar_lea.sflag [#allocation3], 1
    %794 = vsyncpa %s793, 1

</llo_original>
